<compile_context>
chip_gen: v7x
topology: tpu7x:2x2x1
jax: 0.10.0
libtpu: 0.0.40
codegen_flags: <defaults>
</compile_context>

<pallas_src>
import math

import jax
import jax.numpy as jnp
from jax.experimental import pallas as pl
from jax.experimental.pallas import tpu as pltpu

_LANE = 128                      # TPU lane width: last dim stays lane-dense
_TARGET_BLOCK_BYTES = 4 << 20    # ~4 MiB per block amortizes ~0.35 us/step
_VMEM_LIMIT_BYTES = 32 << 20     # in + out, double-buffered -> 16 MiB + headroom


def _copy_kernel(x_ref, o_ref):
    o_ref[...] = x_ref[...]


def _sublane_align(dtype):
    """Minimum sublane multiple for fully-packed vregs (8/16/32 for 4/2/1 B)."""
    itemsize = jnp.dtype(dtype).itemsize
    return max(8, 32 // max(itemsize, 1))


def _copy_2d_lane_dense(x2):
    """Identity copy of a (rows, 128) array with large lane-dense blocks."""
    rows, lane = x2.shape
    itemsize = jnp.dtype(x2.dtype).itemsize
    sub = _sublane_align(x2.dtype)

    if rows <= sub:
        # Tiny array: one block equal to the full array dims (always legal).
        tile_rows = rows
    else:
        target_rows = max(sub, _TARGET_BLOCK_BYTES // (lane * itemsize))
        target_rows = (target_rows // sub) * sub
        rows_up = ((rows + sub - 1) // sub) * sub   # don't allocate past need
        tile_rows = min(target_rows, rows_up)

    grid = (pl.cdiv(rows, tile_rows),)
    return pl.pallas_call(
        _copy_kernel,
        out_shape=jax.ShapeDtypeStruct((rows, lane), x2.dtype),
        grid=grid,
        in_specs=[pl.BlockSpec((tile_rows, lane), lambda i: (i, 0))],
        out_specs=pl.BlockSpec((tile_rows, lane), lambda i: (i, 0)),
        compiler_params=pltpu.CompilerParams(
            dimension_semantics=("parallel",),
            vmem_limit_bytes=_VMEM_LIMIT_BYTES,
        ),
    )(x2)


def _copy_small_block(x2):
    """Single full-array block copy (only used for <128-element remainders)."""
    return pl.pallas_call(
        _copy_kernel,
        out_shape=jax.ShapeDtypeStruct(x2.shape, x2.dtype),
    )(x2)


def _resolve_shape(shape, numel):
    """Resolve a torch.view-style shape (at most one -1) for `numel` elements."""
    shape = tuple(int(s) for s in shape)
    if shape.count(-1) > 1:
        raise ValueError("only one dimension can be inferred (-1)")
    if -1 in shape:
        known = 1
        for s in shape:
            if s != -1:
                known *= s
        if known == 0 or numel % known != 0:
            raise ValueError(f"cannot view {numel} elements as shape {shape}")
        shape = tuple(numel // known if s == -1 else s for s in shape)
    if math.prod(shape) != numel:
        raise ValueError(f"cannot view {numel} elements as shape {shape}")
    return shape


def pallas_view(x, shape, *, use_pallas_copy=True):
    """Equivalent of `x.view(*shape)`.

    With use_pallas_copy=False this is the production answer: a metadata-only
    jnp.reshape (zero HBM traffic).  With use_pallas_copy=True the data is
    routed through a lane-dense Pallas identity-copy kernel.
    """
    tgt = _resolve_shape(shape, x.size)
    n = x.size
    if not use_pallas_copy or n == 0:
        return jnp.reshape(x, tgt)

    if n % _LANE == 0:
        rows = n // _LANE
        x2 = jnp.reshape(x, (rows, _LANE))          # metadata-only reshape
        out2 = _copy_2d_lane_dense(x2)
        return jnp.reshape(out2, tgt)

    # Non-lane-divisible: tile the 128-aligned prefix, copy the <128-element
    # remainder as one tiny full-array block, then stitch flat + reshape.
    flat = jnp.reshape(x, (n,))
    n_main = (n // _LANE) * _LANE
    rem = n - n_main
    parts = []
    if n_main:
        main2 = jnp.reshape(flat[:n_main], (n_main // _LANE, _LANE))
        parts.append(jnp.reshape(_copy_2d_lane_dense(main2), (n_main,)))
    tail2 = jnp.reshape(flat[n_main:], (1, rem))
    parts.append(jnp.reshape(_copy_small_block(tail2), (rem,)))
    out_flat = jnp.concatenate(parts) if len(parts) > 1 else parts[0]
    return jnp.reshape(out_flat, tgt)


class View:
    """Drop-in equivalent of the PyTorch `View` module, backed by a Pallas copy."""

    def __init__(self, shape):
        self.shape = shape

    def __call__(self, x):
        return pallas_view(x, self.shape)


if __name__ == "__main__":
    key = jax.random.PRNGKey(0)
    k1, k2, k3, k4 = jax.random.split(key, 4)

    # Primary small example: (2, 4, 16, 16) -> View((2, -1)) -> (2, 1024)
    x1 = jax.random.normal(k1, (2, 4, 16, 16), jnp.float32)
    y1 = jax.block_until_ready(View((2, -1))(x1))
    assert y1.shape == (2, 1024) and y1.dtype == x1.dtype
    assert bool(jnp.array_equal(y1, jnp.reshape(x1, (2, 1024))))

    # Lane-dense tiled path: (32, 128, 128) -> View((-1, 64, 64)) -> (128, 64, 64)
    x2 = jax.random.normal(k2, (32, 128, 128), jnp.float32)
    y2 = jax.block_until_ready(View((-1, 64, 64))(x2))
    assert y2.shape == (128, 64, 64)
    assert bool(jnp.array_equal(y2, jnp.reshape(x2, (128, 64, 64))))

    # bf16 (dtype-aware sublane alignment): (4, 8, 128) -> (-1, 128)
    x3 = jax.random.normal(k3, (4, 8, 128), jnp.float32).astype(jnp.bfloat16)
    y3 = jax.block_until_ready(View((-1, 128))(x3))
    assert y3.shape == (32, 128) and y3.dtype == jnp.bfloat16
    assert bool(jnp.array_equal(y3, jnp.reshape(x3, (32, 128))))

    # Ragged path (not lane-divisible): 2*5*7 = 70 elements -> (14, 5)
    x4 = jax.random.normal(k4, (2, 5, 7), jnp.float32)
    y4 = jax.block_until_ready(View((14, 5))(x4))
    assert y4.shape == (14, 5)
    assert bool(jnp.array_equal(y4, jnp.reshape(x4, (14, 5))))

    print("KERNEL_OK")
</pallas_src>

<mosaic_0001>
module attributes {stable_mosaic.version = 11 : i64} {
  func.func @_copy_kernel(%arg0: i32, %arg1: memref<16x128xf32, #tpu.memory_space<vmem>>, %arg2: memref<16x128xf32, #tpu.memory_space<vmem>>) attributes {dimension_semantics = [#tpu.dimension_semantics<parallel>], iteration_bounds = array<i64: 1>, scalar_prefetch = 0 : i64, scratch_operands = 0 : i64, tpu.core_type = #tpu.core_type<tc>, window_params = [{transform_indices = @transform_0, window_bounds = array<i64: 16, 128>}, {transform_indices = @transform_1, window_bounds = array<i64: 16, 128>}]} {
    %c0 = arith.constant 0 : index
    %c0_0 = arith.constant 0 : index
    %0 = vector.load %arg1[%c0, %c0_0] : memref<16x128xf32, #tpu.memory_space<vmem>>, vector<16x128xf32>
    %c0_1 = arith.constant 0 : index
    %c0_2 = arith.constant 0 : index
    %1 = vector.load %arg2[%c0_1, %c0_2] : memref<16x128xf32, #tpu.memory_space<vmem>>, vector<16x128xf32>
    tpu.vector_store %arg2[%c0_1, %c0_2], %0 {strides = array<i32>} : memref<16x128xf32, #tpu.memory_space<vmem>>, vector<16x128xf32>,
    return
  }
  func.func @transform_0(%arg0: i32) -> (i32, i32) {
    %c0_i32 = arith.constant 0 : i32
    %c0_i32_0 = arith.constant 0 : i32
    return %arg0, %c0_i32 : i32, i32
  }
  func.func @transform_1(%arg0: i32) -> (i32, i32) {
    %c0_i32 = arith.constant 0 : i32
    %c0_i32_0 = arith.constant 0 : i32
    return %arg0, %c0_i32 : i32, i32
  }
}

</mosaic_0001>

<llo_original>
// kernel: tpu_custom_call.1
$region0: #{tpu_custom_call.1}
  #allocation0 [shape = 'u32[]', space=smem, size = 0x4, offset = 0x4, fixed_abs, tag = 'smem constant byte address 0x4 - core index']
  #allocation1 [shape = 'u32[144,128]{1,0:T(1,128)}', space=vmem, size = 0x12000, scoped, tag = 'internal scratch']
  %s0 = inlined_call_operand.hbm [shape: f32[16,128], index: 0, kind: input, shape index: {}]
  %s1 = inlined_call_operand.hbm [shape: f32[16,128], index: 1, kind: output, shape index: {}]
  %s2 = sld [smem:[#allocation0]]
  $region18: #{tpu_custom_call.1} parent=0
    _
  %s4 = ssub.s32 1, %s2
  %s5 = scalar_select 0, %s4, %s2
  $region1: #{tpu_custom_call.1} parent=0
    #allocation2 [shape = 'u8[8192]{0}', space=vmem, size = 0x2000, scoped, tag = 'input window, operand 0, single buffered']
    #allocation3 [shape = 's32[1]{0}', space=sflag, size = 0x4, scoped, tag = 'scoped memory for tpu_custom_call.1']
    #allocation4 [shape = 's32[1]{0}', space=sflag, size = 0x4, scoped, tag = 'scoped memory for tpu_custom_call.1']
    #allocation5 [shape = 'u8[8192]{0}', space=vmem, size = 0x2000, scoped, tag = 'output window, operand 0, single buffered']
    %6 = vsyncpa [#allocation3], 0
    %7 = vsyncpa [#allocation4], 0
    // Predicated region
    $region2: #{tpu_custom_call.1} parent=1 // pred_check
      _
    $region3: #{tpu_custom_call.1} parent=1 // pred_check_branch
      %9 = sbr.rel (0) target = $region5
    $region4: #{tpu_custom_call.1} parent=1 // pred_region
      %s11 = ssub.s32 256, 256
      %12 = vsyncadd [#allocation3], %s11
      %s13 = sshll.u32 [#allocation2], 4
      %s14 = int_to_ptr.vmem [resolvable:$true] %s13
      %19 = dma.hbm_to_vmem [thread:$0]  %s0, 256, %s14, [#allocation3], 128, 128, 8
    $region5: #{tpu_custom_call.1} parent=1 // pred_fallthru
      _
    // Predicated region
    $region6: #{tpu_custom_call.1} parent=1 // pred_check
      _
    $region7: #{tpu_custom_call.1} parent=1 // pred_check_branch
      %21 = sbr.rel (0) target = $region9
    $region8: #{tpu_custom_call.1} parent=1 // pred_region
      %22 = dma.done [#allocation3], 256
    $region9: #{tpu_custom_call.1} parent=1 // pred_fallthru
      _
    %v23 = vld [vmem:[#allocation2] sm:$0xff]
    %v24 = vld [vmem:[#allocation2 + $0x8] sm:$0xff]
    %25 = vst [vmem:[#allocation5] sm:$0xff] %v23
    %26 = vst [vmem:[#allocation5 + $0x8] sm:$0xff] %v24
    // Predicated region
    $region10: #{tpu_custom_call.1} parent=1 // pred_check
      _
    $region11: #{tpu_custom_call.1} parent=1 // pred_check_branch
      %28 = sbr.rel (0) target = $region13
    $region12: #{tpu_custom_call.1} parent=1 // pred_region
      %s30 = ssub.s32 256, 256
      %31 = vsyncadd [#allocation4], %s30
      %s32 = sshll.u32 [#allocation5], 4
      %s33 = int_to_ptr.vmem [resolvable:$true] %s32
      %38 = dma.vmem_to_hbm [thread:$0]  %s33, 256, %s1, [#allocation4], 128, 128, 8
    $region13: #{tpu_custom_call.1} parent=1 // pred_fallthru
      _
    // Predicated region
    $region14: #{tpu_custom_call.1} parent=1 // pred_check
      _
    $region15: #{tpu_custom_call.1} parent=1 // pred_check_branch
      %40 = sbr.rel (0) target = $region17
    $region16: #{tpu_custom_call.1} parent=1 // pred_region
      %41 = dma.done [#allocation4], 256
    $region17: #{tpu_custom_call.1} parent=1 // pred_fallthru
      _
    %42 = vsyncpa [#allocation3], 1
    %43 = vsyncpa [#allocation4], 1

</llo_original>
